<compile_context>
chip_gen: v6e
topology: v6e:2x2x1
jax: 0.10.0
libtpu: 0.0.40
codegen_flags: <defaults>
</compile_context>

<pallas_src>
import jax
import jax.numpy as jnp
from jax.experimental import pallas as pl
from jax.experimental.pallas import tpu as pltpu

LANE = 128     # lane width  (last-dim tiling)
SUBLANE = 8    # sublane width (second-to-last-dim tiling)


def _round_up(n, m):
    return ((n + m - 1) // m) * m


def qnetwork_kernel(x_ref,
                    w1_ref, b1_ref,
                    w2_ref, b2_ref,
                    w3_ref, b3_ref,
                    w4_ref, b4_ref,
                    o_ref):
    """Fused 4-layer MLP for one batch tile.

    x_ref  : [TB, input_dim]       input dtype (cast to bf16 here)
    w1_ref : [input_dim, h_pad]    bf16 (pre-transposed, lane-padded N)
    w2/3   : [h_pad, h_pad]        bf16
    w4_ref : [h_pad, out_pad]      bf16
    bN_ref : [1, *_pad]            f32  (padded lanes exactly 0)
    o_ref  : [TB, out_pad]         f32
    """
    h = x_ref[...].astype(jnp.bfloat16)      # bf16 MXU operand, f32 accumulate

    h = jnp.dot(h, w1_ref[...], preferred_element_type=jnp.float32) + b1_ref[...]
    h = jnp.maximum(h, 0.0).astype(jnp.bfloat16)

    h = jnp.dot(h, w2_ref[...], preferred_element_type=jnp.float32) + b2_ref[...]
    h = jnp.maximum(h, 0.0).astype(jnp.bfloat16)

    h = jnp.dot(h, w3_ref[...], preferred_element_type=jnp.float32) + b3_ref[...]
    h = jnp.maximum(h, 0.0).astype(jnp.bfloat16)

    out = jnp.dot(h, w4_ref[...], preferred_element_type=jnp.float32) + b4_ref[...]
    o_ref[...] = out.astype(o_ref.dtype)


def qnetwork_forward(x, params, *, batch_tile=1024, out_dtype=jnp.float32):
    """x: [B, input_dim] (any float dtype, like torch's x.float()).
    Returns [B, output_dim] in out_dtype (default f32)."""
    (w1, b1), (w2, b2), (w3, b3), (w4, b4) = params["layers"]
    input_dim = params["input_dim"]
    output_dim = params["output_dim"]
    h_pad = w2.shape[0]
    out_pad = w4.shape[1]

    batch = x.shape[0]
    assert x.shape[1] == input_dim

    # ---- batch tiling: bounded padding, >= 2 grid steps when possible ----
    batch_tile = max(SUBLANE, (int(batch_tile) // SUBLANE) * SUBLANE)  # (8,128) safe
    b_pad = _round_up(batch, SUBLANE)

    # VMEM budget per TensorCore: resident weights + double-buffered streamed
    # tiles + live f32/bf16 layer intermediates.  ~40 MiB is safe on v7x
    # (64 MiB physical per TC) and trivially fits v5e/v6e (128 MiB physical).
    resident_bytes = ((w1.size + w2.size + w3.size + w4.size) * 2          # bf16 W
                      + (b1.size + b2.size + b3.size + b4.size) * 4)       # f32 b
    x_row_bytes = input_dim * max(2, x.dtype.itemsize)
    per_row_bytes = (2 * (x_row_bytes + out_pad * 4)      # 2-deep streamed in/out
                     + h_pad * 6 + out_pad * 4)           # live intermediates
    vmem_budget = 40 << 20
    tb_cap = max(SUBLANE,
                 ((vmem_budget - 2 * resident_bytes) // per_row_bytes)
                 // SUBLANE * SUBLANE)
    tb_limit = min(batch_tile, tb_cap)

    n_steps = pl.cdiv(b_pad, tb_limit)
    if b_pad >= 2 * SUBLANE:
        n_steps = max(n_steps, 2)            # keep both v7x TensorCores busy
    tb = min(_round_up(pl.cdiv(b_pad, n_steps), SUBLANE), tb_limit)
    grid_b = pl.cdiv(b_pad, tb)
    b_final = grid_b * tb                    # padding is O(8 * grid) rows, not O(tile)

    # ---- input: no separate pad/scatter/cast pass unless rows must be padded ----
    if b_final == batch:
        x_in = x                                            # cast in-kernel
    else:
        x_in = jnp.pad(x.astype(jnp.bfloat16),              # one fused pad+cast
                       ((0, b_final - batch), (0, 0)))

    flops = 2 * b_final * (input_dim * h_pad + 2 * h_pad * h_pad + h_pad * out_pad)
    bytes_accessed = (x_in.size * x_in.dtype.itemsize
                      + resident_bytes
                      + b_final * out_pad * jnp.dtype(out_dtype).itemsize)
    cost = pl.CostEstimate(flops=flops, transcendentals=0,
                           bytes_accessed=bytes_accessed)

    def build_and_call(weight_buffers):
        if weight_buffers == 1:
            # Constant index_map -> never re-fetched; one VMEM copy is enough.
            def resident(arr):
                return pl.BlockSpec(arr.shape, lambda i: (0, 0),
                                    pipeline_mode=pl.Buffered(1))
        else:
            def resident(arr):
                return pl.BlockSpec(arr.shape, lambda i: (0, 0))

        in_specs = [
            pl.BlockSpec((tb, input_dim), lambda i: (i, 0)),   # x streamed over batch
            resident(w1), resident(b1),
            resident(w2), resident(b2),
            resident(w3), resident(b3),
            resident(w4), resident(b4),
        ]
        out_specs = pl.BlockSpec((tb, out_pad), lambda i: (i, 0))

        need = weight_buffers * resident_bytes + tb * per_row_bytes
        vmem_limit = int(min(max(int(need * 1.5) + (2 << 20), 32 << 20), 64 << 20))

        return pl.pallas_call(
            qnetwork_kernel,
            out_shape=jax.ShapeDtypeStruct((b_final, out_pad), out_dtype),
            grid=(grid_b,),
            in_specs=in_specs,
            out_specs=out_specs,
            compiler_params=pltpu.CompilerParams(
                dimension_semantics=("parallel",),   # batch shards over v7x's 2 TCs
                vmem_limit_bytes=vmem_limit),
            cost_estimate=cost,
        )(x_in, w1, b1, w2, b2, w3, b3, w4, b4)

    # Probe single-buffered resident weights eagerly; fall back to default
    # double buffering if this backend/toolchain rejects pl.Buffered(1).
    try:
        out_padded = build_and_call(1)
    except Exception:
        out_padded = build_and_call(2)

    return out_padded[:batch, :output_dim]


def init_linear(key, in_dim, out_dim, *, pad_in=True):
    """nn.Linear-style init U(-1/sqrt(in), 1/sqrt(in)).
    Returns ((W bf16 [in or in_pad, out_pad], b f32 [1, out_pad]),
             (W f32 [in, out], b f32 [out]))."""
    kw, kb = jax.random.split(key)
    bound = 1.0 / jnp.sqrt(jnp.float32(in_dim))
    w = jax.random.uniform(kw, (in_dim, out_dim), jnp.float32, -bound, bound)
    b = jax.random.uniform(kb, (out_dim,), jnp.float32, -bound, bound)

    in_p = _round_up(in_dim, LANE) if pad_in else in_dim
    out_p = _round_up(out_dim, LANE)
    w_p = (jnp.zeros((in_p, out_p), jnp.float32)
           .at[:in_dim, :out_dim].set(w).astype(jnp.bfloat16))
    b_p = jnp.zeros((1, out_p), jnp.float32).at[0, :out_dim].set(b)
    return (w_p, b_p), (w, b)


def init_qnetwork_params(key, input_dim, hidden_dim, output_dim):
    k1, k2, k3, k4 = jax.random.split(key, 4)
    l1, f1 = init_linear(k1, input_dim, hidden_dim, pad_in=False)  # K stays = input_dim
    l2, f2 = init_linear(k2, hidden_dim, hidden_dim)
    l3, f3 = init_linear(k3, hidden_dim, hidden_dim)
    l4, f4 = init_linear(k4, hidden_dim, output_dim)
    return {
        "layers": (l1, l2, l3, l4),          # kernel params (bf16 W, padded f32 b)
        "layers_f32": (f1, f2, f3, f4),      # unpadded f32 (torch-exact)
        "input_dim": input_dim,
        "output_dim": output_dim,
    }


def ref_forward_mixed(x, params):
    """Numerical twin of the kernel in plain JAX (bf16 MXU operands, f32 accum)."""
    (w1, b1), (w2, b2), (w3, b3), (w4, b4) = params["layers"]
    h = x.astype(jnp.bfloat16)
    h = jnp.maximum(jnp.dot(h, w1, preferred_element_type=jnp.float32) + b1,
                    0.0).astype(jnp.bfloat16)
    h = jnp.maximum(jnp.dot(h, w2, preferred_element_type=jnp.float32) + b2,
                    0.0).astype(jnp.bfloat16)
    h = jnp.maximum(jnp.dot(h, w3, preferred_element_type=jnp.float32) + b3,
                    0.0).astype(jnp.bfloat16)
    out = jnp.dot(h, w4, preferred_element_type=jnp.float32) + b4
    return out[:, :params["output_dim"]]


def ref_forward_f32(x, params):
    """Pure-f32 torch-equivalent reference."""
    (w1, b1), (w2, b2), (w3, b3), (w4, b4) = params["layers_f32"]
    h = jnp.maximum(x.astype(jnp.float32) @ w1 + b1, 0.0)
    h = jnp.maximum(h @ w2 + b2, 0.0)
    h = jnp.maximum(h @ w3 + b3, 0.0)
    return h @ w4 + b4


if __name__ == "__main__":
    # Small shapes consistent with the module's forward: x is [batch, input_dim].
    batch, input_dim, hidden_dim, output_dim = 2, 16, 32, 8

    root = jax.random.PRNGKey(0)
    kx, kp, kx2 = jax.random.split(root, 3)

    x = jax.random.normal(kx, (batch, input_dim), jnp.float32)
    params = init_qnetwork_params(kp, input_dim, hidden_dim, output_dim)

    out = jax.block_until_ready(qnetwork_forward(x, params))
    assert out.shape == (batch, output_dim)

    # Strict check against the matched mixed-precision reference.
    ref_m = ref_forward_mixed(x, params)
    assert jnp.allclose(out, ref_m, atol=2e-3, rtol=2e-3), "mismatch vs mixed-precision reference"

    # Loose semantic check against the pure-f32 torch-equivalent reference
    # (differences come only from bf16 rounding of the MXU operands).
    ref_f = ref_forward_f32(x, params)
    assert jnp.allclose(out, ref_f, atol=1e-1, rtol=1e-1), "mismatch vs f32 torch reference"

    # Exercise the multi-step grid (>= 2 steps for v7x) + bounded row-padding path.
    x2 = jax.random.normal(kx2, (19, input_dim), jnp.float32)
    out2 = jax.block_until_ready(qnetwork_forward(x2, params))
    assert out2.shape == (19, output_dim)
    assert jnp.allclose(out2, ref_forward_mixed(x2, params), atol=2e-3, rtol=2e-3), \
        "mismatch vs mixed-precision reference (multi-step grid)"

    print("KERNEL_OK")
</pallas_src>

<mosaic_0001>
module attributes {stable_mosaic.version = 11 : i64} {
  func.func @qnetwork_kernel(%arg0: i32, %arg1: memref<8x16xbf16, #tpu.memory_space<vmem>>, %arg2: memref<16x128xbf16, #tpu.memory_space<vmem>>, %arg3: memref<1x128xf32, #tpu.memory_space<vmem>>, %arg4: memref<128x128xbf16, #tpu.memory_space<vmem>>, %arg5: memref<1x128xf32, #tpu.memory_space<vmem>>, %arg6: memref<128x128xbf16, #tpu.memory_space<vmem>>, %arg7: memref<1x128xf32, #tpu.memory_space<vmem>>, %arg8: memref<128x128xbf16, #tpu.memory_space<vmem>>, %arg9: memref<1x128xf32, #tpu.memory_space<vmem>>, %arg10: memref<8x128xf32, #tpu.memory_space<vmem>>) attributes {dimension_semantics = [#tpu.dimension_semantics<parallel>], iteration_bounds = array<i64: 1>, scalar_prefetch = 0 : i64, scratch_operands = 0 : i64, tpu.core_type = #tpu.core_type<tc>, window_params = [{transform_indices = @transform_0, window_bounds = array<i64: 8, 16>}, {pipeline_mode = #tpu.pipeline_mode<synchronous>, transform_indices = @transform_1, window_bounds = array<i64: 16, 128>}, {pipeline_mode = #tpu.pipeline_mode<synchronous>, transform_indices = @transform_2, window_bounds = array<i64: 1, 128>}, {pipeline_mode = #tpu.pipeline_mode<synchronous>, transform_indices = @transform_3, window_bounds = array<i64: 128, 128>}, {pipeline_mode = #tpu.pipeline_mode<synchronous>, transform_indices = @transform_4, window_bounds = array<i64: 1, 128>}, {pipeline_mode = #tpu.pipeline_mode<synchronous>, transform_indices = @transform_5, window_bounds = array<i64: 128, 128>}, {pipeline_mode = #tpu.pipeline_mode<synchronous>, transform_indices = @transform_6, window_bounds = array<i64: 1, 128>}, {pipeline_mode = #tpu.pipeline_mode<synchronous>, transform_indices = @transform_7, window_bounds = array<i64: 128, 128>}, {pipeline_mode = #tpu.pipeline_mode<synchronous>, transform_indices = @transform_8, window_bounds = array<i64: 1, 128>}, {transform_indices = @transform_9, window_bounds = array<i64: 8, 128>}]} {
    %c0 = arith.constant 0 : index
    %c0_0 = arith.constant 0 : index
    %0 = vector.load %arg1[%c0, %c0_0] : memref<8x16xbf16, #tpu.memory_space<vmem>>, vector<8x16xbf16>
    %c0_1 = arith.constant 0 : index
    %c0_2 = arith.constant 0 : index
    %1 = vector.load %arg2[%c0_1, %c0_2] : memref<16x128xbf16, #tpu.memory_space<vmem>>, vector<16x128xbf16>
    %cst = arith.constant dense<0.000000e+00> : vector<8x128xf32>
    %2 = tpu.matmul %0, %1, %cst {dimension_numbers = #tpu.dot_dimension_numbers<[1], [0], [0], [1], [0, 0, 1, 1], [], []>} : vector<8x16xbf16>, vector<16x128xbf16>, vector<8x128xf32> -> vector<8x128xf32>
    %c0_3 = arith.constant 0 : index
    %c0_4 = arith.constant 0 : index
    %3 = vector.load %arg3[%c0_3, %c0_4] : memref<1x128xf32, #tpu.memory_space<vmem>>, vector<1x128xf32>
    %4 = vector.broadcast %3 : vector<1x128xf32> to vector<8x128xf32>
    %5 = arith.addf %2, %4 : vector<8x128xf32>
    %cst_5 = arith.constant 0.000000e+00 : f32
    %6 = vector.broadcast %cst_5 : f32 to vector<8x128xf32>
    %7 = arith.maximumf %5, %6 : vector<8x128xf32>
    %8 = arith.truncf %7 : vector<8x128xf32> to vector<8x128xbf16>
    %c0_6 = arith.constant 0 : index
    %c0_7 = arith.constant 0 : index
    %9 = vector.load %arg4[%c0_6, %c0_7] : memref<128x128xbf16, #tpu.memory_space<vmem>>, vector<128x128xbf16>
    %cst_8 = arith.constant dense<0.000000e+00> : vector<8x128xf32>
    %10 = tpu.matmul %8, %9, %cst_8 {dimension_numbers = #tpu.dot_dimension_numbers<[1], [0], [0], [1], [0, 0, 1, 1], [], []>} : vector<8x128xbf16>, vector<128x128xbf16>, vector<8x128xf32> -> vector<8x128xf32>
    %c0_9 = arith.constant 0 : index
    %c0_10 = arith.constant 0 : index
    %11 = vector.load %arg5[%c0_9, %c0_10] : memref<1x128xf32, #tpu.memory_space<vmem>>, vector<1x128xf32>
    %12 = vector.broadcast %11 : vector<1x128xf32> to vector<8x128xf32>
    %13 = arith.addf %10, %12 : vector<8x128xf32>
    %cst_11 = arith.constant 0.000000e+00 : f32
    %14 = vector.broadcast %cst_11 : f32 to vector<8x128xf32>
    %15 = arith.maximumf %13, %14 : vector<8x128xf32>
    %16 = arith.truncf %15 : vector<8x128xf32> to vector<8x128xbf16>
    %c0_12 = arith.constant 0 : index
    %c0_13 = arith.constant 0 : index
    %17 = vector.load %arg6[%c0_12, %c0_13] : memref<128x128xbf16, #tpu.memory_space<vmem>>, vector<128x128xbf16>
    %cst_14 = arith.constant dense<0.000000e+00> : vector<8x128xf32>
    %18 = tpu.matmul %16, %17, %cst_14 {dimension_numbers = #tpu.dot_dimension_numbers<[1], [0], [0], [1], [0, 0, 1, 1], [], []>} : vector<8x128xbf16>, vector<128x128xbf16>, vector<8x128xf32> -> vector<8x128xf32>
    %c0_15 = arith.constant 0 : index
    %c0_16 = arith.constant 0 : index
    %19 = vector.load %arg7[%c0_15, %c0_16] : memref<1x128xf32, #tpu.memory_space<vmem>>, vector<1x128xf32>
    %20 = vector.broadcast %19 : vector<1x128xf32> to vector<8x128xf32>
    %21 = arith.addf %18, %20 : vector<8x128xf32>
    %cst_17 = arith.constant 0.000000e+00 : f32
    %22 = vector.broadcast %cst_17 : f32 to vector<8x128xf32>
    %23 = arith.maximumf %21, %22 : vector<8x128xf32>
    %24 = arith.truncf %23 : vector<8x128xf32> to vector<8x128xbf16>
    %c0_18 = arith.constant 0 : index
    %c0_19 = arith.constant 0 : index
    %25 = vector.load %arg8[%c0_18, %c0_19] : memref<128x128xbf16, #tpu.memory_space<vmem>>, vector<128x128xbf16>
    %cst_20 = arith.constant dense<0.000000e+00> : vector<8x128xf32>
    %26 = tpu.matmul %24, %25, %cst_20 {dimension_numbers = #tpu.dot_dimension_numbers<[1], [0], [0], [1], [0, 0, 1, 1], [], []>} : vector<8x128xbf16>, vector<128x128xbf16>, vector<8x128xf32> -> vector<8x128xf32>
    %c0_21 = arith.constant 0 : index
    %c0_22 = arith.constant 0 : index
    %27 = vector.load %arg9[%c0_21, %c0_22] : memref<1x128xf32, #tpu.memory_space<vmem>>, vector<1x128xf32>
    %28 = vector.broadcast %27 : vector<1x128xf32> to vector<8x128xf32>
    %29 = arith.addf %26, %28 : vector<8x128xf32>
    %c0_23 = arith.constant 0 : index
    %c0_24 = arith.constant 0 : index
    %30 = vector.load %arg10[%c0_23, %c0_24] : memref<8x128xf32, #tpu.memory_space<vmem>>, vector<8x128xf32>
    tpu.vector_store %arg10[%c0_23, %c0_24], %29 {strides = array<i32>} : memref<8x128xf32, #tpu.memory_space<vmem>>, vector<8x128xf32>,
    return
  }
  func.func @transform_0(%arg0: i32) -> (i32, i32) {
    %c0_i32 = arith.constant 0 : i32
    %c0_i32_0 = arith.constant 0 : i32
    return %arg0, %c0_i32 : i32, i32
  }
  func.func @transform_1(%arg0: i32) -> (i32, i32) {
    %c0_i32 = arith.constant 0 : i32
    %c0_i32_0 = arith.constant 0 : i32
    %c0_i32_1 = arith.constant 0 : i32
    return %c0_i32, %c0_i32_0 : i32, i32
  }
  func.func @transform_2(%arg0: i32) -> (i32, i32) {
    %c0_i32 = arith.constant 0 : i32
    %c0_i32_0 = arith.constant 0 : i32
    %c0_i32_1 = arith.constant 0 : i32
    return %c0_i32, %c0_i32_0 : i32, i32
  }
  func.func @transform_3(%arg0: i32) -> (i32, i32) {
    %c0_i32 = arith.constant 0 : i32
    %c0_i32_0 = arith.constant 0 : i32
    %c0_i32_1 = arith.constant 0 : i32
    return %c0_i32, %c0_i32_0 : i32, i32
  }
  func.func @transform_4(%arg0: i32) -> (i32, i32) {
    %c0_i32 = arith.constant 0 : i32
    %c0_i32_0 = arith.constant 0 : i32
    %c0_i32_1 = arith.constant 0 : i32
    return %c0_i32, %c0_i32_0 : i32, i32
  }
  func.func @transform_5(%arg0: i32) -> (i32, i32) {
    %c0_i32 = arith.constant 0 : i32
    %c0_i32_0 = arith.constant 0 : i32
    %c0_i32_1 = arith.constant 0 : i32
    return %c0_i32, %c0_i32_0 : i32, i32
  }
  func.func @transform_6(%arg0: i32) -> (i32, i32) {
    %c0_i32 = arith.constant 0 : i32
    %c0_i32_0 = arith.constant 0 : i32
    %c0_i32_1 = arith.constant 0 : i32
    return %c0_i32, %c0_i32_0 : i32, i32
  }
  func.func @transform_7(%arg0: i32) -> (i32, i32) {
    %c0_i32 = arith.constant 0 : i32
    %c0_i32_0 = arith.constant 0 : i32
    %c0_i32_1 = arith.constant 0 : i32
    return %c0_i32, %c0_i32_0 : i32, i32
  }
  func.func @transform_8(%arg0: i32) -> (i32, i32) {
    %c0_i32 = arith.constant 0 : i32
    %c0_i32_0 = arith.constant 0 : i32
    %c0_i32_1 = arith.constant 0 : i32
    return %c0_i32, %c0_i32_0 : i32, i32
  }
  func.func @transform_9(%arg0: i32) -> (i32, i32) {
    %c0_i32 = arith.constant 0 : i32
    %c0_i32_0 = arith.constant 0 : i32
    return %arg0, %c0_i32 : i32, i32
  }
}

module attributes {stable_mosaic.version = 11 : i64} {
  func.func @qnetwork_kernel(%arg0: i32, %arg1: memref<8x16xbf16, #tpu.memory_space<vmem>>, %arg2: memref<16x128xbf16, #tpu.memory_space<vmem>>, %arg3: memref<1x128xf32, #tpu.memory_space<vmem>>, %arg4: memref<128x128xbf16, #tpu.memory_space<vmem>>, %arg5: memref<1x128xf32, #tpu.memory_space<vmem>>, %arg6: memref<128x128xbf16, #tpu.memory_space<vmem>>, %arg7: memref<1x128xf32, #tpu.memory_space<vmem>>, %arg8: memref<128x128xbf16, #tpu.memory_space<vmem>>, %arg9: memref<1x128xf32, #tpu.memory_space<vmem>>, %arg10: memref<8x128xf32, #tpu.memory_space<vmem>>) attributes {dimension_semantics = [#tpu.dimension_semantics<parallel>], iteration_bounds = array<i64: 1>, scalar_prefetch = 0 : i64, scratch_operands = 0 : i64, tpu.core_type = #tpu.core_type<tc>, window_params = [{transform_indices = @transform_0, window_bounds = array<i64: 8, 16>}, {pipeline_mode = #tpu.pipeline_mode<synchronous>, transform_indices = @transform_1, window_bounds = array<i64: 16, 128>}, {pipeline_mode = #tpu.pipeline_mode<synchronous>, transform_indices = @transform_2, window_bounds = array<i64: 1, 128>}, {pipeline_mode = #tpu.pipeline_mode<synchronous>, transform_indices = @transform_3, window_bounds = array<i64: 128, 128>}, {pipeline_mode = #tpu.pipeline_mode<synchronous>, transform_indices = @transform_4, window_bounds = array<i64: 1, 128>}, {pipeline_mode = #tpu.pipeline_mode<synchronous>, transform_indices = @transform_5, window_bounds = array<i64: 128, 128>}, {pipeline_mode = #tpu.pipeline_mode<synchronous>, transform_indices = @transform_6, window_bounds = array<i64: 1, 128>}, {pipeline_mode = #tpu.pipeline_mode<synchronous>, transform_indices = @transform_7, window_bounds = array<i64: 128, 128>}, {pipeline_mode = #tpu.pipeline_mode<synchronous>, transform_indices = @transform_8, window_bounds = array<i64: 1, 128>}, {transform_indices = @transform_9, window_bounds = array<i64: 8, 128>}]} {
    %c0 = arith.constant 0 : index
    %c0_0 = arith.constant 0 : index
    %0 = vector.load %arg1[%c0, %c0_0] : memref<8x16xbf16, #tpu.memory_space<vmem>>, vector<8x16xbf16>
    %c0_1 = arith.constant 0 : index
    %c0_2 = arith.constant 0 : index
    %1 = vector.load %arg2[%c0_1, %c0_2] : memref<16x128xbf16, #tpu.memory_space<vmem>>, vector<16x128xbf16>
    %cst = arith.constant dense<0.000000e+00> : vector<8x128xf32>
    %2 = tpu.matmul %0, %1, %cst {dimension_numbers = #tpu.dot_dimension_numbers<[1], [0], [0], [1], [0, 0, 1, 1], [], []>} : vector<8x16xbf16>, vector<16x128xbf16>, vector<8x128xf32> -> vector<8x128xf32>
    %c0_3 = arith.constant 0 : index
    %c0_4 = arith.constant 0 : index
    %3 = vector.load %arg3[%c0_3, %c0_4] : memref<1x128xf32, #tpu.memory_space<vmem>>, vector<1x128xf32>
    %4 = vector.broadcast %3 : vector<1x128xf32> to vector<8x128xf32>
    %5 = arith.addf %2, %4 : vector<8x128xf32>
    %cst_5 = arith.constant 0.000000e+00 : f32
    %6 = vector.broadcast %cst_5 : f32 to vector<8x128xf32>
    %7 = arith.maximumf %5, %6 : vector<8x128xf32>
    %8 = arith.truncf %7 : vector<8x128xf32> to vector<8x128xbf16>
    %c0_6 = arith.constant 0 : index
    %c0_7 = arith.constant 0 : index
    %9 = vector.load %arg4[%c0_6, %c0_7] : memref<128x128xbf16, #tpu.memory_space<vmem>>, vector<128x128xbf16>
    %cst_8 = arith.constant dense<0.000000e+00> : vector<8x128xf32>
    %10 = tpu.matmul %8, %9, %cst_8 {dimension_numbers = #tpu.dot_dimension_numbers<[1], [0], [0], [1], [0, 0, 1, 1], [], []>} : vector<8x128xbf16>, vector<128x128xbf16>, vector<8x128xf32> -> vector<8x128xf32>
    %c0_9 = arith.constant 0 : index
    %c0_10 = arith.constant 0 : index
    %11 = vector.load %arg5[%c0_9, %c0_10] : memref<1x128xf32, #tpu.memory_space<vmem>>, vector<1x128xf32>
    %12 = vector.broadcast %11 : vector<1x128xf32> to vector<8x128xf32>
    %13 = arith.addf %10, %12 : vector<8x128xf32>
    %cst_11 = arith.constant 0.000000e+00 : f32
    %14 = vector.broadcast %cst_11 : f32 to vector<8x128xf32>
    %15 = arith.maximumf %13, %14 : vector<8x128xf32>
    %16 = arith.truncf %15 : vector<8x128xf32> to vector<8x128xbf16>
    %c0_12 = arith.constant 0 : index
    %c0_13 = arith.constant 0 : index
    %17 = vector.load %arg6[%c0_12, %c0_13] : memref<128x128xbf16, #tpu.memory_space<vmem>>, vector<128x128xbf16>
    %cst_14 = arith.constant dense<0.000000e+00> : vector<8x128xf32>
    %18 = tpu.matmul %16, %17, %cst_14 {dimension_numbers = #tpu.dot_dimension_numbers<[1], [0], [0], [1], [0, 0, 1, 1], [], []>} : vector<8x128xbf16>, vector<128x128xbf16>, vector<8x128xf32> -> vector<8x128xf32>
    %c0_15 = arith.constant 0 : index
    %c0_16 = arith.constant 0 : index
    %19 = vector.load %arg7[%c0_15, %c0_16] : memref<1x128xf32, #tpu.memory_space<vmem>>, vector<1x128xf32>
    %20 = vector.broadcast %19 : vector<1x128xf32> to vector<8x128xf32>
    %21 = arith.addf %18, %20 : vector<8x128xf32>
    %cst_17 = arith.constant 0.000000e+00 : f32
    %22 = vector.broadcast %cst_17 : f32 to vector<8x128xf32>
    %23 = arith.maximumf %21, %22 : vector<8x128xf32>
    %24 = arith.truncf %23 : vector<8x128xf32> to vector<8x128xbf16>
    %c0_18 = arith.constant 0 : index
    %c0_19 = arith.constant 0 : index
    %25 = vector.load %arg8[%c0_18, %c0_19] : memref<128x128xbf16, #tpu.memory_space<vmem>>, vector<128x128xbf16>
    %cst_20 = arith.constant dense<0.000000e+00> : vector<8x128xf32>
    %26 = tpu.matmul %24, %25, %cst_20 {dimension_numbers = #tpu.dot_dimension_numbers<[1], [0], [0], [1], [0, 0, 1, 1], [], []>} : vector<8x128xbf16>, vector<128x128xbf16>, vector<8x128xf32> -> vector<8x128xf32>
    %c0_21 = arith.constant 0 : index
    %c0_22 = arith.constant 0 : index
    %27 = vector.load %arg9[%c0_21, %c0_22] : memref<1x128xf32, #tpu.memory_space<vmem>>, vector<1x128xf32>
    %28 = vector.broadcast %27 : vector<1x128xf32> to vector<8x128xf32>
    %29 = arith.addf %26, %28 : vector<8x128xf32>
    %c0_23 = arith.constant 0 : index
    %c0_24 = arith.constant 0 : index
    %30 = vector.load %arg10[%c0_23, %c0_24] : memref<8x128xf32, #tpu.memory_space<vmem>>, vector<8x128xf32>
    tpu.vector_store %arg10[%c0_23, %c0_24], %29 {strides = array<i32>} : memref<8x128xf32, #tpu.memory_space<vmem>>, vector<8x128xf32>,
    return
  }
  func.func @transform_0(%arg0: i32) -> (i32, i32) {
    %c0_i32 = arith.constant 0 : i32
    %c0_i32_0 = arith.constant 0 : i32
    return %arg0, %c0_i32 : i32, i32
  }
  func.func @transform_1(%arg0: i32) -> (i32, i32) {
    %c0_i32 = arith.constant 0 : i32
    %c0_i32_0 = arith.constant 0 : i32
    %c0_i32_1 = arith.constant 0 : i32
    return %c0_i32, %c0_i32_0 : i32, i32
  }
  func.func @transform_2(%arg0: i32) -> (i32, i32) {
    %c0_i32 = arith.constant 0 : i32
    %c0_i32_0 = arith.constant 0 : i32
    %c0_i32_1 = arith.constant 0 : i32
    return %c0_i32, %c0_i32_0 : i32, i32
  }
  func.func @transform_3(%arg0: i32) -> (i32, i32) {
    %c0_i32 = arith.constant 0 : i32
    %c0_i32_0 = arith.constant 0 : i32
    %c0_i32_1 = arith.constant 0 : i32
    return %c0_i32, %c0_i32_0 : i32, i32
  }
  func.func @transform_4(%arg0: i32) -> (i32, i32) {
    %c0_i32 = arith.constant 0 : i32
    %c0_i32_0 = arith.constant 0 : i32
    %c0_i32_1 = arith.constant 0 : i32
    return %c0_i32, %c0_i32_0 : i32, i32
  }
  func.func @transform_5(%arg0: i32) -> (i32, i32) {
    %c0_i32 = arith.constant 0 : i32
    %c0_i32_0 = arith.constant 0 : i32
    %c0_i32_1 = arith.constant 0 : i32
    return %c0_i32, %c0_i32_0 : i32, i32
  }
  func.func @transform_6(%arg0: i32) -> (i32, i32) {
    %c0_i32 = arith.constant 0 : i32
    %c0_i32_0 = arith.constant 0 : i32
    %c0_i32_1 = arith.constant 0 : i32
    return %c0_i32, %c0_i32_0 : i32, i32
  }
  func.func @transform_7(%arg0: i32) -> (i32, i32) {
    %c0_i32 = arith.constant 0 : i32
    %c0_i32_0 = arith.constant 0 : i32
    %c0_i32_1 = arith.constant 0 : i32
    return %c0_i32, %c0_i32_0 : i32, i32
  }
  func.func @transform_8(%arg0: i32) -> (i32, i32) {
    %c0_i32 = arith.constant 0 : i32
    %c0_i32_0 = arith.constant 0 : i32
    %c0_i32_1 = arith.constant 0 : i32
    return %c0_i32, %c0_i32_0 : i32, i32
  }
  func.func @transform_9(%arg0: i32) -> (i32, i32) {
    %c0_i32 = arith.constant 0 : i32
    %c0_i32_0 = arith.constant 0 : i32
    return %arg0, %c0_i32 : i32, i32
  }
}

</mosaic_0001>

<llo_original>
// kernel: tpu_custom_call.1
$region0: #{tpu_custom_call.1}
  #allocation0 [shape = 'u32[]', space=smem, size = 0x4, offset = 0x4, fixed_abs, tag = 'smem constant byte address 0x4 - core index']
  #allocation1 [shape = 'u32[144,128]{1,0:T(1,128)}', space=vmem, size = 0x12000, scoped, tag = 'internal scratch']
  %s0 = inlined_call_operand.hbm [shape: bf16[8,16], index: 0, kind: input, shape index: {}]
  %s1 = inlined_call_operand.hbm [shape: bf16[16,128], index: 1, kind: input, shape index: {}]
  %s2 = inlined_call_operand.vmem [shape: f32[1,128], index: 2, kind: input, shape index: {}]
  %s3 = inlined_call_operand.hbm [shape: bf16[128,128], index: 3, kind: input, shape index: {}]
  %s4 = inlined_call_operand.vmem [shape: f32[1,128], index: 4, kind: input, shape index: {}]
  %s5 = inlined_call_operand.hbm [shape: bf16[128,128], index: 5, kind: input, shape index: {}]
  %s6 = inlined_call_operand.vmem [shape: f32[1,128], index: 6, kind: input, shape index: {}]
  %s7 = inlined_call_operand.hbm [shape: bf16[128,128], index: 7, kind: input, shape index: {}]
  %s8 = inlined_call_operand.vmem [shape: f32[1,128], index: 8, kind: input, shape index: {}]
  %s9 = inlined_call_operand.hbm [shape: f32[8,128], index: 9, kind: output, shape index: {}]
  %s10 = sld [smem:[#allocation0]]
  $region66: #{tpu_custom_call.1} parent=0
    _
  %s12 = ssub.s32 1, %s10
  %s13 = scalar_select 0, %s12, %s10
  $region1: #{tpu_custom_call.1} parent=0
    #allocation2 [shape = 'u8[2048]{0}', space=vmem, size = 0x800, scoped, tag = 'input window, operand 0, single buffered']
    #allocation3 [shape = 's32[1]{0}', space=sflag, size = 0x4, scoped, tag = 'scoped memory for tpu_custom_call.1']
    #allocation4 [shape = 's32[1]{0}', space=sflag, size = 0x4, scoped, tag = 'scoped memory for tpu_custom_call.1']
    #allocation5 [shape = 'u8[4096]{0}', space=vmem, size = 0x1000, scoped, tag = 'input window, operand 1, single buffered']
    #allocation6 [shape = 's32[1]{0}', space=sflag, size = 0x4, scoped, tag = 'scoped memory for tpu_custom_call.1']
    #allocation7 [shape = 'u8[32768]{0}', space=vmem, size = 0x8000, scoped, tag = 'input window, operand 3, single buffered']
    #allocation8 [shape = 'u8[32768]{0}', space=vmem, size = 0x8000, scoped, tag = 'input window, operand 5, single buffered']
    #allocation9 [shape = 's32[1]{0}', space=sflag, size = 0x4, scoped, tag = 'scoped memory for tpu_custom_call.1']
    #allocation10 [shape = 'u8[32768]{0}', space=vmem, size = 0x8000, scoped, tag = 'input window, operand 7, single buffered']
    #allocation11 [shape = 'u8[4096]{0}', space=vmem, size = 0x1000, scoped, tag = 'output window, operand 0, single buffered']
    %14 = vsyncpa [#allocation3], 0
    %15 = vsyncpa [#allocation6], 0
    %16 = vsyncpa [#allocation9], 0
    %17 = vsyncpa [#allocation4], 0
    // Predicated region
    $region2: #{tpu_custom_call.1} parent=1 // pred_check
      _
    $region3: #{tpu_custom_call.1} parent=1 // pred_check_branch
      %19 = sbr.rel (0) target = $region5
    $region4: #{tpu_custom_call.1} parent=1 // pred_region
      %s21 = ssub.s32 64, 64
      %22 = vsyncadd [#allocation3], %s21
      %s24 = sshll.u32 [#allocation2], 4
      %s25 = int_to_ptr.vmem [resolvable:$true] %s24
      %27 = dma.hbm_to_vmem [thread:$0]  %s0, 64, %s25, [#allocation3]
    $region5: #{tpu_custom_call.1} parent=1 // pred_fallthru
      _
    // Predicated region
    $region6: #{tpu_custom_call.1} parent=1 // pred_check
      _
    $region7: #{tpu_custom_call.1} parent=1 // pred_check_branch
      %29 = sbr.rel (0) target = $region9
    $region8: #{tpu_custom_call.1} parent=1 // pred_region
      %s31 = ssub.s32 128, 128
      %32 = vsyncadd [#allocation6], %s31
      %s33 = sshll.u32 [#allocation5], 4
      %s34 = int_to_ptr.vmem [resolvable:$true] %s33
      %39 = dma.hbm_to_vmem [thread:$0]  %s1, 128, %s34, [#allocation6], 64, 64, 4
    $region9: #{tpu_custom_call.1} parent=1 // pred_fallthru
      _
    // Predicated region
    $region10: #{tpu_custom_call.1} parent=1 // pred_check
      _
    $region11: #{tpu_custom_call.1} parent=1 // pred_check_branch
      %41 = sbr.rel (0) target = $region13
    $region12: #{tpu_custom_call.1} parent=1 // pred_region
      _
    $region13: #{tpu_custom_call.1} parent=1 // pred_fallthru
      _
    // Predicated region
    $region14: #{tpu_custom_call.1} parent=1 // pred_check
      _
    $region15: #{tpu_custom_call.1} parent=1 // pred_check_branch
      %43 = sbr.rel (0) target = $region17
    $region16: #{tpu_custom_call.1} parent=1 // pred_region
      %s45 = ssub.s32 1024, 1024
      %46 = vsyncadd [#allocation6], %s45
      %s47 = sshll.u32 [#allocation7], 4
      %s48 = int_to_ptr.vmem [resolvable:$true] %s47
      %53 = dma.hbm_to_vmem [thread:$0]  %s3, 1024, %s48, [#allocation6], 64, 64, 4
    $region17: #{tpu_custom_call.1} parent=1 // pred_fallthru
      _
    // Predicated region
    $region18: #{tpu_custom_call.1} parent=1 // pred_check
      _
    $region19: #{tpu_custom_call.1} parent=1 // pred_check_branch
      %55 = sbr.rel (0) target = $region21
    $region20: #{tpu_custom_call.1} parent=1 // pred_region
      _
    $region21: #{tpu_custom_call.1} parent=1 // pred_fallthru
      _
    // Predicated region
    $region22: #{tpu_custom_call.1} parent=1 // pred_check
      _
    $region23: #{tpu_custom_call.1} parent=1 // pred_check_branch
      %57 = sbr.rel (0) target = $region25
    $region24: #{tpu_custom_call.1} parent=1 // pred_region
      %s59 = ssub.s32 1024, 1024
      %60 = vsyncadd [#allocation9], %s59
      %s61 = sshll.u32 [#allocation8], 4
      %s62 = int_to_ptr.vmem [resolvable:$true] %s61
      %67 = dma.hbm_to_vmem [thread:$0]  %s5, 1024, %s62, [#allocation9], 64, 64, 4
    $region25: #{tpu_custom_call.1} parent=1 // pred_fallthru
      _
    // Predicated region
    $region26: #{tpu_custom_call.1} parent=1 // pred_check
      _
    $region27: #{tpu_custom_call.1} parent=1 // pred_check_branch
      %69 = sbr.rel (0) target = $region29
    $region28: #{tpu_custom_call.1} parent=1 // pred_region
      _
    $region29: #{tpu_custom_call.1} parent=1 // pred_fallthru
      _
    // Predicated region
    $region30: #{tpu_custom_call.1} parent=1 // pred_check
      _
    $region31: #{tpu_custom_call.1} parent=1 // pred_check_branch
      %71 = sbr.rel (0) target = $region33
    $region32: #{tpu_custom_call.1} parent=1 // pred_region
      %s73 = ssub.s32 1024, 1024
      %74 = vsyncadd [#allocation9], %s73
      %s75 = sshll.u32 [#allocation10], 4
      %s76 = int_to_ptr.vmem [resolvable:$true] %s75
      %81 = dma.hbm_to_vmem [thread:$0]  %s7, 1024, %s76, [#allocation9], 64, 64, 4
    $region33: #{tpu_custom_call.1} parent=1 // pred_fallthru
      _
    // Predicated region
    $region34: #{tpu_custom_call.1} parent=1 // pred_check
      _
    $region35: #{tpu_custom_call.1} parent=1 // pred_check_branch
      %83 = sbr.rel (0) target = $region37
    $region36: #{tpu_custom_call.1} parent=1 // pred_region
      _
    $region37: #{tpu_custom_call.1} parent=1 // pred_fallthru
      _
    // Predicated region
    $region38: #{tpu_custom_call.1} parent=1 // pred_check
      _
    $region39: #{tpu_custom_call.1} parent=1 // pred_check_branch
      %85 = sbr.rel (0) target = $region41
    $region40: #{tpu_custom_call.1} parent=1 // pred_region
      %86 = dma.done [#allocation3], 64
    $region41: #{tpu_custom_call.1} parent=1 // pred_fallthru
      _
    // Predicated region
    $region42: #{tpu_custom_call.1} parent=1 // pred_check
      _
    $region43: #{tpu_custom_call.1} parent=1 // pred_check_branch
      %88 = sbr.rel (0) target = $region45
    $region44: #{tpu_custom_call.1} parent=1 // pred_region
      %89 = dma.done [#allocation6], 128
    $region45: #{tpu_custom_call.1} parent=1 // pred_fallthru
      _
    // Predicated region
    $region46: #{tpu_custom_call.1} parent=1 // pred_check
      _
    $region47: #{tpu_custom_call.1} parent=1 // pred_check_branch
      %91 = sbr.rel (0) target = $region49
    $region48: #{tpu_custom_call.1} parent=1 // pred_region
      %92 = dma.done [#allocation6], 1024
    $region49: #{tpu_custom_call.1} parent=1 // pred_fallthru
      _
    // Predicated region
    $region50: #{tpu_custom_call.1} parent=1 // pred_check
      _
    $region51: #{tpu_custom_call.1} parent=1 // pred_check_branch
      %94 = sbr.rel (0) target = $region53
    $region52: #{tpu_custom_call.1} parent=1 // pred_region
      %95 = dma.done [#allocation9], 1024
    $region53: #{tpu_custom_call.1} parent=1 // pred_fallthru
      _
    // Predicated region
    $region54: #{tpu_custom_call.1} parent=1 // pred_check
      _
    $region55: #{tpu_custom_call.1} parent=1 // pred_check_branch
      %97 = sbr.rel (0) target = $region57
    $region56: #{tpu_custom_call.1} parent=1 // pred_region
      %98 = dma.done [#allocation9], 1024
    $region57: #{tpu_custom_call.1} parent=1 // pred_fallthru
      _
    %v100 = vld [vmem:[#allocation2] sm:$0xf]
    %v101 = vld [vmem:[#allocation5] sm:$0xf]
    %v102 = vld [vmem:[#allocation5 + $0x4] sm:$0xf]
    %v103 = vld [vmem:[%s2] sm:$0x1]
    %v105 = vlaneseq
    %v106 = vshrl.u32 %v105, 7
    %v107 = vsub.s32 0, %v106
    %v108 = vrot.slane %v103, %v107
    %v112 = vunpack.c.l.b16 %v101
    %v113 = vunpack.c.l.b16 %v102
    %v114 = vpack.c.b16 %v113, %v112
    %vm116 = vcmask 130048
    %v118 = vsel %vm116, %v100, 0
    %120 = vmatprep.subr.bf16.mxu0 0
    %121 = vmatpush1.bf16.msra.mxu0 0
    %122 = vmatprep.subr.bf16.mxu0 0
    %123 = vmatpush1.bf16.msra.mxu0 0
    %124 = vmatprep.subr.bf16.mxu0 0
    %125 = vmatpush1.bf16.msra.mxu0 0
    %126 = vmatprep.subr.bf16.mxu0 0
    %127 = vmatpush1.bf16.msra.mxu0 0
    %128 = vmatprep.subr.bf16.mxu0 0
    %129 = vmatpush1.bf16.msra.mxu0 0
    %130 = vmatprep.subr.bf16.mxu0 0
    %131 = vmatpush1.bf16.msra.mxu0 0
    %132 = vmatprep.subr.bf16.mxu0 0
    %133 = vmatpush1.bf16.msra.mxu0 0
    %134 = vmatprep.subr.bf16.mxu0 0
    %135 = vmatpush1.bf16.msra.mxu0 %v114
    %136 = vmatprep.subr.bf16.mxu0 0
    %137 = vmatpush2.bf16.msra.mxu0 0
    %138 = vmatprep.subr.bf16.mxu0 0
    %139 = vmatpush2.bf16.msra.mxu0 0
    %140 = vmatprep.subr.bf16.mxu0 0
    %141 = vmatpush2.bf16.msra.mxu0 0
    %142 = vmatprep.subr.bf16.mxu0 0
    %143 = vmatpush2.bf16.msra.mxu0 0
    %144 = vmatprep.subr.bf16.mxu0 0
    %145 = vmatpush2.bf16.msra.mxu0 0
    %146 = vmatprep.subr.bf16.mxu0 0
    %147 = vmatpush2.bf16.msra.mxu0 0
    %148 = vmatprep.subr.bf16.mxu0 0
    %149 = vmatpush2.bf16.msra.mxu0 0
    %150 = vmatprep.subr.bf16.mxu0 0
    %151 = vmatpush2.bf16.msra.mxu0 0
    %152 = vmatprep.mubr.bf16.mxu0 0
    %153 = vmatmul.mubr.bf16.gmra.mxu0 %v118
    %v154 = vpop.f32.mrf.mxu0
    %v155 = vadd.f32 %v108, %v154
    %v156 = vpop.f32.mrf.mxu0
    %v157 = vpop.f32.mrf.mxu0
    %v158 = vpop.f32.mrf.mxu0
    %159 = vdwg.mxu0
    %v160 = vmax.f32 %v155, 0.0
    %v161 = vpack.c.bf16 %v160, %v160
    %v162 = vld [vmem:[#allocation7] sm:$0xf]
    %v163 = vld [vmem:[#allocation7 + $0x4] sm:$0xf]
    %v164 = vld [vmem:[#allocation7 + $0x8] sm:$0xf]
    %v165 = vld [vmem:[#allocation7 + $0xc] sm:$0xf]
    %v166 = vld [vmem:[#allocation7 + $0x10] sm:$0xf]
    %v167 = vld [vmem:[#allocation7 + $0x14] sm:$0xf]
    %v168 = vld [vmem:[#allocation7 + $0x18] sm:$0xf]
    %v169 = vld [vmem:[#allocation7 + $0x1c] sm:$0xf]
    %v170 = vld [vmem:[#allocation7 + $0x20] sm:$0xf]
    %v171 = vld [vmem:[#allocation7 + $0x24] sm:$0xf]
    %v172 = vld [vmem:[#allocation7 + $0x28] sm:$0xf]
    %v173 = vld [vmem:[#allocation7 + $0x2c] sm:$0xf]
    %v174 = vld [vmem:[#allocation7 + $0x30] sm:$0xf]
    %v175 = vld [vmem:[#allocation7 + $0x34] sm:$0xf]
    %v176 = vld [vmem:[#allocation7 + $0x38] sm:$0xf]
    %v177 = vld [vmem:[#allocation7 + $0x3c] sm:$0xf]
    %v178 = vld [vmem:[%s4] sm:$0x1]
    %v180 = vlaneseq
    %v181 = vshrl.u32 %v180, 7
    %v182 = vsub.s32 0, %v181
    %v183 = vrot.slane %v178, %v182
    %v201 = vunpack.c.l.b16 %v162
    %v202 = vunpack.c.l.b16 %v163
    %v203 = vunpack.c.l.b16 %v164
    %v204 = vunpack.c.l.b16 %v165
    %v205 = vunpack.c.l.b16 %v166
    %v206 = vunpack.c.l.b16 %v167
    %v207 = vunpack.c.l.b16 %v168
    %v208 = vunpack.c.l.b16 %v169
    %v209 = vunpack.c.l.b16 %v170
    %v210 = vunpack.c.l.b16 %v171
    %v211 = vunpack.c.l.b16 %v172
    %v212 = vunpack.c.l.b16 %v173
    %v213 = vunpack.c.l.b16 %v174
    %v214 = vunpack.c.l.b16 %v175
    %v215 = vunpack.c.l.b16 %v176
    %v216 = vunpack.c.l.b16 %v177
    %v217 = vpack.c.b16 %v202, %v201
    %v218 = vpack.c.b16 %v204, %v203
    %v219 = vpack.c.b16 %v206, %v205
    %v220 = vpack.c.b16 %v208, %v207
    %v221 = vpack.c.b16 %v210, %v209
    %v222 = vpack.c.b16 %v212, %v211
    %v223 = vpack.c.b16 %v214, %v213
    %v224 = vpack.c.b16 %v216, %v215
    %233 = vmatprep.subr.bf16.mxu0 0
    %234 = vmatpush1.bf16.msra.mxu0 %v224
    %235 = vmatprep.subr.bf16.mxu0 0
    %236 = vmatpush1.bf16.msra.mxu0 %v223
    %237 = vmatprep.subr.bf16.mxu0 0
    %238 = vmatpush1.bf16.msra.mxu0 %v222
    %239 = vmatprep.subr.bf16.mxu0 0
    %240 = vmatpush1.bf16.msra.mxu0 %v221
    %241 = vmatprep.subr.bf16.mxu0 0
    %242 = vmatpush1.bf16.msra.mxu0 %v220
    %243 = vmatprep.subr.bf16.mxu0 0
    %244 = vmatpush1.bf16.msra.mxu0 %v219
    %245 = vmatprep.subr.bf16.mxu0 0
    %246 = vmatpush1.bf16.msra.mxu0 %v218
    %247 = vmatprep.subr.bf16.mxu0 0
    %248 = vmatpush1.bf16.msra.mxu0 %v217
    %249 = vmatprep.subr.bf16.mxu0 0
    %250 = vmatpush2.bf16.msra.mxu0 0
    %251 = vmatprep.subr.bf16.mxu0 0
    %252 = vmatpush2.bf16.msra.mxu0 0
    %253 = vmatprep.subr.bf16.mxu0 0
    %254 = vmatpush2.bf16.msra.mxu0 0
    %255 = vmatprep.subr.bf16.mxu0 0
    %256 = vmatpush2.bf16.msra.mxu0 0
    %257 = vmatprep.subr.bf16.mxu0 0
    %258 = vmatpush2.bf16.msra.mxu0 0
    %259 = vmatprep.subr.bf16.mxu0 0
    %260 = vmatpush2.bf16.msra.mxu0 0
    %261 = vmatprep.subr.bf16.mxu0 0
    %262 = vmatpush2.bf16.msra.mxu0 0
    %263 = vmatprep.subr.bf16.mxu0 0
    %264 = vmatpush2.bf16.msra.mxu0 0
    %265 = vmatprep.mubr.bf16.mxu0 0
    %266 = vmatmul.mubr.bf16.gmra.mxu0 %v161
    %v267 = vpop.f32.mrf.mxu0
    %v268 = vadd.f32 %v183, %v267
    %v269 = vpop.f32.mrf.mxu0
    %v270 = vpop.f32.mrf.mxu0
    %v271 = vpop.f32.mrf.mxu0
    %272 = vdwg.mxu0
    %v273 = vmax.f32 %v268, 0.0
    %v274 = vpack.c.bf16 %v273, %v273
    %v275 = vld [vmem:[#allocation8] sm:$0xf]
    %v276 = vld [vmem:[#allocation8 + $0x4] sm:$0xf]
    %v277 = vld [vmem:[#allocation8 + $0x8] sm:$0xf]
    %v278 = vld [vmem:[#allocation8 + $0xc] sm:$0xf]
    %v279 = vld [vmem:[#allocation8 + $0x10] sm:$0xf]
    %v280 = vld [vmem:[#allocation8 + $0x14] sm:$0xf]
    %v281 = vld [vmem:[#allocation8 + $0x18] sm:$0xf]
    %v282 = vld [vmem:[#allocation8 + $0x1c] sm:$0xf]
    %v283 = vld [vmem:[#allocation8 + $0x20] sm:$0xf]
    %v284 = vld [vmem:[#allocation8 + $0x24] sm:$0xf]
    %v285 = vld [vmem:[#allocation8 + $0x28] sm:$0xf]
    %v286 = vld [vmem:[#allocation8 + $0x2c] sm:$0xf]
    %v287 = vld [vmem:[#allocation8 + $0x30] sm:$0xf]
    %v288 = vld [vmem:[#allocation8 + $0x34] sm:$0xf]
    %v289 = vld [vmem:[#allocation8 + $0x38] sm:$0xf]
    %v290 = vld [vmem:[#allocation8 + $0x3c] sm:$0xf]
    %v291 = vld [vmem:[%s6] sm:$0x1]
    %v293 = vlaneseq
    %v294 = vshrl.u32 %v293, 7
    %v295 = vsub.s32 0, %v294
    %v296 = vrot.slane %v291, %v295
    %v314 = vunpack.c.l.b16 %v275
    %v315 = vunpack.c.l.b16 %v276
    %v316 = vunpack.c.l.b16 %v277
    %v317 = vunpack.c.l.b16 %v278
    %v318 = vunpack.c.l.b16 %v279
    %v319 = vunpack.c.l.b16 %v280
    %v320 = vunpack.c.l.b16 %v281
    %v321 = vunpack.c.l.b16 %v282
    %v322 = vunpack.c.l.b16 %v283
    %v323 = vunpack.c.l.b16 %v284
    %v324 = vunpack.c.l.b16 %v285
    %v325 = vunpack.c.l.b16 %v286
    %v326 = vunpack.c.l.b16 %v287
    %v327 = vunpack.c.l.b16 %v288
    %v328 = vunpack.c.l.b16 %v289
    %v329 = vunpack.c.l.b16 %v290
    %v330 = vpack.c.b16 %v315, %v314
    %v331 = vpack.c.b16 %v317, %v316
    %v332 = vpack.c.b16 %v319, %v318
    %v333 = vpack.c.b16 %v321, %v320
    %v334 = vpack.c.b16 %v323, %v322
    %v335 = vpack.c.b16 %v325, %v324
    %v336 = vpack.c.b16 %v327, %v326
    %v337 = vpack.c.b16 %v329, %v328
    %346 = vmatprep.subr.bf16.mxu0 0
    %347 = vmatpush1.bf16.msra.mxu0 %v337
    %348 = vmatprep.subr.bf16.mxu0 0
    %349 = vmatpush1.bf16.msra.mxu0 %v336
    %350 = vmatprep.subr.bf16.mxu0 0
    %351 = vmatpush1.bf16.msra.mxu0 %v335
    %352 = vmatprep.subr.bf16.mxu0 0
    %353 = vmatpush1.bf16.msra.mxu0 %v334
    %354 = vmatprep.subr.bf16.mxu0 0
    %355 = vmatpush1.bf16.msra.mxu0 %v333
    %356 = vmatprep.subr.bf16.mxu0 0
    %357 = vmatpush1.bf16.msra.mxu0 %v332
    %358 = vmatprep.subr.bf16.mxu0 0
    %359 = vmatpush1.bf16.msra.mxu0 %v331
    %360 = vmatprep.subr.bf16.mxu0 0
    %361 = vmatpush1.bf16.msra.mxu0 %v330
    %362 = vmatprep.subr.bf16.mxu0 0
    %363 = vmatpush2.bf16.msra.mxu0 0
    %364 = vmatprep.subr.bf16.mxu0 0
    %365 = vmatpush2.bf16.msra.mxu0 0
    %366 = vmatprep.subr.bf16.mxu0 0
    %367 = vmatpush2.bf16.msra.mxu0 0
    %368 = vmatprep.subr.bf16.mxu0 0
    %369 = vmatpush2.bf16.msra.mxu0 0
    %370 = vmatprep.subr.bf16.mxu0 0
    %371 = vmatpush2.bf16.msra.mxu0 0
    %372 = vmatprep.subr.bf16.mxu0 0
    %373 = vmatpush2.bf16.msra.mxu0 0
    %374 = vmatprep.subr.bf16.mxu0 0
    %375 = vmatpush2.bf16.msra.mxu0 0
    %376 = vmatprep.subr.bf16.mxu0 0
    %377 = vmatpush2.bf16.msra.mxu0 0
    %378 = vmatprep.mubr.bf16.mxu0 0
    %379 = vmatmul.mubr.bf16.gmra.mxu0 %v274
    %v380 = vpop.f32.mrf.mxu0
    %v381 = vadd.f32 %v296, %v380
    %v382 = vpop.f32.mrf.mxu0
    %v383 = vpop.f32.mrf.mxu0
    %v384 = vpop.f32.mrf.mxu0
    %385 = vdwg.mxu0
    %v386 = vmax.f32 %v381, 0.0
    %v387 = vpack.c.bf16 %v386, %v386
    %v388 = vld [vmem:[#allocation10] sm:$0xf]
    %v389 = vld [vmem:[#allocation10 + $0x4] sm:$0xf]
    %v390 = vld [vmem:[#allocation10 + $0x8] sm:$0xf]
    %v391 = vld [vmem:[#allocation10 + $0xc] sm:$0xf]
    %v392 = vld [vmem:[#allocation10 + $0x10] sm:$0xf]
    %v393 = vld [vmem:[#allocation10 + $0x14] sm:$0xf]
    %v394 = vld [vmem:[#allocation10 + $0x18] sm:$0xf]
    %v395 = vld [vmem:[#allocation10 + $0x1c] sm:$0xf]
    %v396 = vld [vmem:[#allocation10 + $0x20] sm:$0xf]
    %v397 = vld [vmem:[#allocation10 + $0x24] sm:$0xf]
    %v398 = vld [vmem:[#allocation10 + $0x28] sm:$0xf]
    %v399 = vld [vmem:[#allocation10 + $0x2c] sm:$0xf]
    %v400 = vld [vmem:[#allocation10 + $0x30] sm:$0xf]
    %v401 = vld [vmem:[#allocation10 + $0x34] sm:$0xf]
    %v402 = vld [vmem:[#allocation10 + $0x38] sm:$0xf]
    %v403 = vld [vmem:[#allocation10 + $0x3c] sm:$0xf]
    %v404 = vld [vmem:[%s8] sm:$0x1]
    %v406 = vlaneseq
    %v407 = vshrl.u32 %v406, 7
    %v408 = vsub.s32 0, %v407
    %v409 = vrot.slane %v404, %v408
    %v427 = vunpack.c.l.b16 %v388
    %v428 = vunpack.c.l.b16 %v389
    %v429 = vunpack.c.l.b16 %v390
    %v430 = vunpack.c.l.b16 %v391
    %v431 = vunpack.c.l.b16 %v392
    %v432 = vunpack.c.l.b16 %v393
    %v433 = vunpack.c.l.b16 %v394
    %v434 = vunpack.c.l.b16 %v395
    %v435 = vunpack.c.l.b16 %v396
    %v436 = vunpack.c.l.b16 %v397
    %v437 = vunpack.c.l.b16 %v398
    %v438 = vunpack.c.l.b16 %v399
    %v439 = vunpack.c.l.b16 %v400
    %v440 = vunpack.c.l.b16 %v401
    %v441 = vunpack.c.l.b16 %v402
    %v442 = vunpack.c.l.b16 %v403
    %v443 = vpack.c.b16 %v428, %v427
    %v444 = vpack.c.b16 %v430, %v429
    %v445 = vpack.c.b16 %v432, %v431
    %v446 = vpack.c.b16 %v434, %v433
    %v447 = vpack.c.b16 %v436, %v435
    %v448 = vpack.c.b16 %v438, %v437
    %v449 = vpack.c.b16 %v440, %v439
    %v450 = vpack.c.b16 %v442, %v441
    %459 = vmatprep.subr.bf16.mxu0 0
    %460 = vmatpush1.bf16.msra.mxu0 %v450
    %461 = vmatprep.subr.bf16.mxu0 0
    %462 = vmatpush1.bf16.msra.mxu0 %v449
    %463 = vmatprep.subr.bf16.mxu0 0
    %464 = vmatpush1.bf16.msra.mxu0 %v448
    %465 = vmatprep.subr.bf16.mxu0 0
    %466 = vmatpush1.bf16.msra.mxu0 %v447
    %467 = vmatprep.subr.bf16.mxu0 0
    %468 = vmatpush1.bf16.msra.mxu0 %v446
    %469 = vmatprep.subr.bf16.mxu0 0
    %470 = vmatpush1.bf16.msra.mxu0 %v445
    %471 = vmatprep.subr.bf16.mxu0 0
    %472 = vmatpush1.bf16.msra.mxu0 %v444
    %473 = vmatprep.subr.bf16.mxu0 0
    %474 = vmatpush1.bf16.msra.mxu0 %v443
    %475 = vmatprep.subr.bf16.mxu0 0
    %476 = vmatpush2.bf16.msra.mxu0 0
    %477 = vmatprep.subr.bf16.mxu0 0
    %478 = vmatpush2.bf16.msra.mxu0 0
    %479 = vmatprep.subr.bf16.mxu0 0
    %480 = vmatpush2.bf16.msra.mxu0 0
    %481 = vmatprep.subr.bf16.mxu0 0
    %482 = vmatpush2.bf16.msra.mxu0 0
    %483 = vmatprep.subr.bf16.mxu0 0
    %484 = vmatpush2.bf16.msra.mxu0 0
    %485 = vmatprep.subr.bf16.mxu0 0
    %486 = vmatpush2.bf16.msra.mxu0 0
    %487 = vmatprep.subr.bf16.mxu0 0
    %488 = vmatpush2.bf16.msra.mxu0 0
    %489 = vmatprep.subr.bf16.mxu0 0
    %490 = vmatpush2.bf16.msra.mxu0 0
    %491 = vmatprep.mubr.bf16.mxu0 0
    %492 = vmatmul.mubr.bf16.gmra.mxu0 %v387
    %v493 = vpop.f32.mrf.mxu0
    %v494 = vadd.f32 %v409, %v493
    %v495 = vpop.f32.mrf.mxu0
    %v496 = vpop.f32.mrf.mxu0
    %v497 = vpop.f32.mrf.mxu0
    %498 = vdwg.mxu0
    %499 = vst [vmem:[#allocation11] sm:$0xff] %v494
    // Predicated region
    $region58: #{tpu_custom_call.1} parent=1 // pred_check
      _
    $region59: #{tpu_custom_call.1} parent=1 // pred_check_branch
      %501 = sbr.rel (0) target = $region61
    $region60: #{tpu_custom_call.1} parent=1 // pred_region
      %s503 = ssub.s32 128, 128
      %504 = vsyncadd [#allocation4], %s503
      %s506 = sshll.u32 [#allocation11], 4
      %s507 = int_to_ptr.vmem [resolvable:$true] %s506
      %509 = dma.vmem_to_hbm [thread:$0]  %s507, 128, %s9, [#allocation4]
    $region61: #{tpu_custom_call.1} parent=1 // pred_fallthru
      _
    // Predicated region
    $region62: #{tpu_custom_call.1} parent=1 // pred_check
      _
    $region63: #{tpu_custom_call.1} parent=1 // pred_check_branch
      %511 = sbr.rel (0) target = $region65
    $region64: #{tpu_custom_call.1} parent=1 // pred_region
      %512 = dma.done [#allocation4], 128
    $region65: #{tpu_custom_call.1} parent=1 // pred_fallthru
      _
    %513 = vsyncpa [#allocation3], 1
    %514 = vsyncpa [#allocation6], 1
    %515 = vsyncpa [#allocation9], 1
    %516 = vsyncpa [#allocation4], 1

// kernel: tpu_custom_call.1
$region0: #{tpu_custom_call.1}
  #allocation0 [shape = 'u32[]', space=smem, size = 0x4, offset = 0x4, fixed_abs, tag = 'smem constant byte address 0x4 - core index']
  #allocation1 [shape = 'u32[144,128]{1,0:T(1,128)}', space=vmem, size = 0x12000, scoped, tag = 'internal scratch']
  %s0 = inlined_call_operand.hbm [shape: bf16[8,16], index: 0, kind: input, shape index: {}]
  %s1 = inlined_call_operand.hbm [shape: bf16[16,128], index: 1, kind: input, shape index: {}]
  %s2 = inlined_call_operand.vmem [shape: f32[1,128], index: 2, kind: input, shape index: {}]
  %s3 = inlined_call_operand.hbm [shape: bf16[128,128], index: 3, kind: input, shape index: {}]
  %s4 = inlined_call_operand.vmem [shape: f32[1,128], index: 4, kind: input, shape index: {}]
  %s5 = inlined_call_operand.hbm [shape: bf16[128,128], index: 5, kind: input, shape index: {}]
  %s6 = inlined_call_operand.vmem [shape: f32[1,128], index: 6, kind: input, shape index: {}]
  %s7 = inlined_call_operand.hbm [shape: bf16[128,128], index: 7, kind: input, shape index: {}]
  %s8 = inlined_call_operand.vmem [shape: f32[1,128], index: 8, kind: input, shape index: {}]
  %s9 = inlined_call_operand.hbm [shape: f32[8,128], index: 9, kind: output, shape index: {}]
  %s10 = sld [smem:[#allocation0]]
  $region66: #{tpu_custom_call.1} parent=0
    _
  %s12 = ssub.s32 1, %s10
  %s13 = scalar_select 0, %s12, %s10
  $region1: #{tpu_custom_call.1} parent=0
    #allocation2 [shape = 'u8[2048]{0}', space=vmem, size = 0x800, scoped, tag = 'input window, operand 0, single buffered']
    #allocation3 [shape = 's32[1]{0}', space=sflag, size = 0x4, scoped, tag = 'scoped memory for tpu_custom_call.1']
    #allocation4 [shape = 's32[1]{0}', space=sflag, size = 0x4, scoped, tag = 'scoped memory for tpu_custom_call.1']
    #allocation5 [shape = 'u8[4096]{0}', space=vmem, size = 0x1000, scoped, tag = 'input window, operand 1, single buffered']
    #allocation6 [shape = 's32[1]{0}', space=sflag, size = 0x4, scoped, tag = 'scoped memory for tpu_custom_call.1']
    #allocation7 [shape = 'u8[32768]{0}', space=vmem, size = 0x8000, scoped, tag = 'input window, operand 3, single buffered']
    #allocation8 [shape = 'u8[32768]{0}', space=vmem, size = 0x8000, scoped, tag = 'input window, operand 5, single buffered']
    #allocation9 [shape = 's32[1]{0}', space=sflag, size = 0x4, scoped, tag = 'scoped memory for tpu_custom_call.1']
    #allocation10 [shape = 'u8[32768]{0}', space=vmem, size = 0x8000, scoped, tag = 'input window, operand 7, single buffered']
    #allocation11 [shape = 'u8[4096]{0}', space=vmem, size = 0x1000, scoped, tag = 'output window, operand 0, single buffered']
    %14 = vsyncpa [#allocation3], 0
    %15 = vsyncpa [#allocation6], 0
    %16 = vsyncpa [#allocation9], 0
    %17 = vsyncpa [#allocation4], 0
    // Predicated region
    $region2: #{tpu_custom_call.1} parent=1 // pred_check
      _
    $region3: #{tpu_custom_call.1} parent=1 // pred_check_branch
      %19 = sbr.rel (0) target = $region5
    $region4: #{tpu_custom_call.1} parent=1 // pred_region
      %s21 = ssub.s32 64, 64
      %22 = vsyncadd [#allocation3], %s21
      %s24 = sshll.u32 [#allocation2], 4
      %s25 = int_to_ptr.vmem [resolvable:$true] %s24
      %27 = dma.hbm_to_vmem [thread:$0]  %s0, 64, %s25, [#allocation3]
    $region5: #{tpu_custom_call.1} parent=1 // pred_fallthru
      _
    // Predicated region
    $region6: #{tpu_custom_call.1} parent=1 // pred_check
      _
    $region7: #{tpu_custom_call.1} parent=1 // pred_check_branch
      %29 = sbr.rel (0) target = $region9
    $region8: #{tpu_custom_call.1} parent=1 // pred_region
      %s31 = ssub.s32 128, 128
      %32 = vsyncadd [#allocation6], %s31
      %s33 = sshll.u32 [#allocation5], 4
      %s34 = int_to_ptr.vmem [resolvable:$true] %s33
      %39 = dma.hbm_to_vmem [thread:$0]  %s1, 128, %s34, [#allocation6], 64, 64, 4
    $region9: #{tpu_custom_call.1} parent=1 // pred_fallthru
      _
    // Predicated region
    $region10: #{tpu_custom_call.1} parent=1 // pred_check
      _
    $region11: #{tpu_custom_call.1} parent=1 // pred_check_branch
      %41 = sbr.rel (0) target = $region13
    $region12: #{tpu_custom_call.1} parent=1 // pred_region
      _
    $region13: #{tpu_custom_call.1} parent=1 // pred_fallthru
      _
    // Predicated region
    $region14: #{tpu_custom_call.1} parent=1 // pred_check
      _
    $region15: #{tpu_custom_call.1} parent=1 // pred_check_branch
      %43 = sbr.rel (0) target = $region17
    $region16: #{tpu_custom_call.1} parent=1 // pred_region
      %s45 = ssub.s32 1024, 1024
      %46 = vsyncadd [#allocation6], %s45
      %s47 = sshll.u32 [#allocation7], 4
      %s48 = int_to_ptr.vmem [resolvable:$true] %s47
      %53 = dma.hbm_to_vmem [thread:$0]  %s3, 1024, %s48, [#allocation6], 64, 64, 4
    $region17: #{tpu_custom_call.1} parent=1 // pred_fallthru
      _
    // Predicated region
    $region18: #{tpu_custom_call.1} parent=1 // pred_check
      _
    $region19: #{tpu_custom_call.1} parent=1 // pred_check_branch
      %55 = sbr.rel (0) target = $region21
    $region20: #{tpu_custom_call.1} parent=1 // pred_region
      _
    $region21: #{tpu_custom_call.1} parent=1 // pred_fallthru
      _
    // Predicated region
    $region22: #{tpu_custom_call.1} parent=1 // pred_check
      _
    $region23: #{tpu_custom_call.1} parent=1 // pred_check_branch
      %57 = sbr.rel (0) target = $region25
    $region24: #{tpu_custom_call.1} parent=1 // pred_region
      %s59 = ssub.s32 1024, 1024
      %60 = vsyncadd [#allocation9], %s59
      %s61 = sshll.u32 [#allocation8], 4
      %s62 = int_to_ptr.vmem [resolvable:$true] %s61
      %67 = dma.hbm_to_vmem [thread:$0]  %s5, 1024, %s62, [#allocation9], 64, 64, 4
    $region25: #{tpu_custom_call.1} parent=1 // pred_fallthru
      _
    // Predicated region
    $region26: #{tpu_custom_call.1} parent=1 // pred_check
      _
    $region27: #{tpu_custom_call.1} parent=1 // pred_check_branch
      %69 = sbr.rel (0) target = $region29
    $region28: #{tpu_custom_call.1} parent=1 // pred_region
      _
    $region29: #{tpu_custom_call.1} parent=1 // pred_fallthru
      _
    // Predicated region
    $region30: #{tpu_custom_call.1} parent=1 // pred_check
      _
    $region31: #{tpu_custom_call.1} parent=1 // pred_check_branch
      %71 = sbr.rel (0) target = $region33
    $region32: #{tpu_custom_call.1} parent=1 // pred_region
      %s73 = ssub.s32 1024, 1024
      %74 = vsyncadd [#allocation9], %s73
      %s75 = sshll.u32 [#allocation10], 4
      %s76 = int_to_ptr.vmem [resolvable:$true] %s75
      %81 = dma.hbm_to_vmem [thread:$0]  %s7, 1024, %s76, [#allocation9], 64, 64, 4
    $region33: #{tpu_custom_call.1} parent=1 // pred_fallthru
      _
    // Predicated region
    $region34: #{tpu_custom_call.1} parent=1 // pred_check
      _
    $region35: #{tpu_custom_call.1} parent=1 // pred_check_branch
      %83 = sbr.rel (0) target = $region37
    $region36: #{tpu_custom_call.1} parent=1 // pred_region
      _
    $region37: #{tpu_custom_call.1} parent=1 // pred_fallthru
      _
    // Predicated region
    $region38: #{tpu_custom_call.1} parent=1 // pred_check
      _
    $region39: #{tpu_custom_call.1} parent=1 // pred_check_branch
      %85 = sbr.rel (0) target = $region41
    $region40: #{tpu_custom_call.1} parent=1 // pred_region
      %86 = dma.done [#allocation3], 64
    $region41: #{tpu_custom_call.1} parent=1 // pred_fallthru
      _
    // Predicated region
    $region42: #{tpu_custom_call.1} parent=1 // pred_check
      _
    $region43: #{tpu_custom_call.1} parent=1 // pred_check_branch
      %88 = sbr.rel (0) target = $region45
    $region44: #{tpu_custom_call.1} parent=1 // pred_region
      %89 = dma.done [#allocation6], 128
    $region45: #{tpu_custom_call.1} parent=1 // pred_fallthru
      _
    // Predicated region
    $region46: #{tpu_custom_call.1} parent=1 // pred_check
      _
    $region47: #{tpu_custom_call.1} parent=1 // pred_check_branch
      %91 = sbr.rel (0) target = $region49
    $region48: #{tpu_custom_call.1} parent=1 // pred_region
      %92 = dma.done [#allocation6], 1024
    $region49: #{tpu_custom_call.1} parent=1 // pred_fallthru
      _
    // Predicated region
    $region50: #{tpu_custom_call.1} parent=1 // pred_check
      _
    $region51: #{tpu_custom_call.1} parent=1 // pred_check_branch
      %94 = sbr.rel (0) target = $region53
    $region52: #{tpu_custom_call.1} parent=1 // pred_region
      %95 = dma.done [#allocation9], 1024
    $region53: #{tpu_custom_call.1} parent=1 // pred_fallthru
      _
    // Predicated region
    $region54: #{tpu_custom_call.1} parent=1 // pred_check
      _
    $region55: #{tpu_custom_call.1} parent=1 // pred_check_branch
      %97 = sbr.rel (0) target = $region57
    $region56: #{tpu_custom_call.1} parent=1 // pred_region
      %98 = dma.done [#allocation9], 1024
    $region57: #{tpu_custom_call.1} parent=1 // pred_fallthru
      _
    %v100 = vld [vmem:[#allocation2] sm:$0xf]
    %v101 = vld [vmem:[#allocation5] sm:$0xf]
    %v102 = vld [vmem:[#allocation5 + $0x4] sm:$0xf]
    %v103 = vld [vmem:[%s2] sm:$0x1]
    %v105 = vlaneseq
    %v106 = vshrl.u32 %v105, 7
    %v107 = vsub.s32 0, %v106
    %v108 = vrot.slane %v103, %v107
    %v112 = vunpack.c.l.b16 %v101
    %v113 = vunpack.c.l.b16 %v102
    %v114 = vpack.c.b16 %v113, %v112
    %vm116 = vcmask 130048
    %v118 = vsel %vm116, %v100, 0
    %120 = vmatprep.subr.bf16.mxu0 0
    %121 = vmatpush1.bf16.msra.mxu0 0
    %122 = vmatprep.subr.bf16.mxu0 0
    %123 = vmatpush1.bf16.msra.mxu0 0
    %124 = vmatprep.subr.bf16.mxu0 0
    %125 = vmatpush1.bf16.msra.mxu0 0
    %126 = vmatprep.subr.bf16.mxu0 0
    %127 = vmatpush1.bf16.msra.mxu0 0
    %128 = vmatprep.subr.bf16.mxu0 0
    %129 = vmatpush1.bf16.msra.mxu0 0
    %130 = vmatprep.subr.bf16.mxu0 0
    %131 = vmatpush1.bf16.msra.mxu0 0
    %132 = vmatprep.subr.bf16.mxu0 0
    %133 = vmatpush1.bf16.msra.mxu0 0
    %134 = vmatprep.subr.bf16.mxu0 0
    %135 = vmatpush1.bf16.msra.mxu0 %v114
    %136 = vmatprep.subr.bf16.mxu0 0
    %137 = vmatpush2.bf16.msra.mxu0 0
    %138 = vmatprep.subr.bf16.mxu0 0
    %139 = vmatpush2.bf16.msra.mxu0 0
    %140 = vmatprep.subr.bf16.mxu0 0
    %141 = vmatpush2.bf16.msra.mxu0 0
    %142 = vmatprep.subr.bf16.mxu0 0
    %143 = vmatpush2.bf16.msra.mxu0 0
    %144 = vmatprep.subr.bf16.mxu0 0
    %145 = vmatpush2.bf16.msra.mxu0 0
    %146 = vmatprep.subr.bf16.mxu0 0
    %147 = vmatpush2.bf16.msra.mxu0 0
    %148 = vmatprep.subr.bf16.mxu0 0
    %149 = vmatpush2.bf16.msra.mxu0 0
    %150 = vmatprep.subr.bf16.mxu0 0
    %151 = vmatpush2.bf16.msra.mxu0 0
    %152 = vmatprep.mubr.bf16.mxu0 0
    %153 = vmatmul.mubr.bf16.gmra.mxu0 %v118
    %v154 = vpop.f32.mrf.mxu0
    %v155 = vadd.f32 %v108, %v154
    %v156 = vpop.f32.mrf.mxu0
    %v157 = vpop.f32.mrf.mxu0
    %v158 = vpop.f32.mrf.mxu0
    %159 = vdwg.mxu0
    %v160 = vmax.f32 %v155, 0.0
    %v161 = vpack.c.bf16 %v160, %v160
    %v162 = vld [vmem:[#allocation7] sm:$0xf]
    %v163 = vld [vmem:[#allocation7 + $0x4] sm:$0xf]
    %v164 = vld [vmem:[#allocation7 + $0x8] sm:$0xf]
    %v165 = vld [vmem:[#allocation7 + $0xc] sm:$0xf]
    %v166 = vld [vmem:[#allocation7 + $0x10] sm:$0xf]
    %v167 = vld [vmem:[#allocation7 + $0x14] sm:$0xf]
    %v168 = vld [vmem:[#allocation7 + $0x18] sm:$0xf]
    %v169 = vld [vmem:[#allocation7 + $0x1c] sm:$0xf]
    %v170 = vld [vmem:[#allocation7 + $0x20] sm:$0xf]
    %v171 = vld [vmem:[#allocation7 + $0x24] sm:$0xf]
    %v172 = vld [vmem:[#allocation7 + $0x28] sm:$0xf]
    %v173 = vld [vmem:[#allocation7 + $0x2c] sm:$0xf]
    %v174 = vld [vmem:[#allocation7 + $0x30] sm:$0xf]
    %v175 = vld [vmem:[#allocation7 + $0x34] sm:$0xf]
    %v176 = vld [vmem:[#allocation7 + $0x38] sm:$0xf]
    %v177 = vld [vmem:[#allocation7 + $0x3c] sm:$0xf]
    %v178 = vld [vmem:[%s4] sm:$0x1]
    %v180 = vlaneseq
    %v181 = vshrl.u32 %v180, 7
    %v182 = vsub.s32 0, %v181
    %v183 = vrot.slane %v178, %v182
    %v201 = vunpack.c.l.b16 %v162
    %v202 = vunpack.c.l.b16 %v163
    %v203 = vunpack.c.l.b16 %v164
    %v204 = vunpack.c.l.b16 %v165
    %v205 = vunpack.c.l.b16 %v166
    %v206 = vunpack.c.l.b16 %v167
    %v207 = vunpack.c.l.b16 %v168
    %v208 = vunpack.c.l.b16 %v169
    %v209 = vunpack.c.l.b16 %v170
    %v210 = vunpack.c.l.b16 %v171
    %v211 = vunpack.c.l.b16 %v172
    %v212 = vunpack.c.l.b16 %v173
    %v213 = vunpack.c.l.b16 %v174
    %v214 = vunpack.c.l.b16 %v175
    %v215 = vunpack.c.l.b16 %v176
    %v216 = vunpack.c.l.b16 %v177
    %v217 = vpack.c.b16 %v202, %v201
    %v218 = vpack.c.b16 %v204, %v203
    %v219 = vpack.c.b16 %v206, %v205
    %v220 = vpack.c.b16 %v208, %v207
    %v221 = vpack.c.b16 %v210, %v209
    %v222 = vpack.c.b16 %v212, %v211
    %v223 = vpack.c.b16 %v214, %v213
    %v224 = vpack.c.b16 %v216, %v215
    %233 = vmatprep.subr.bf16.mxu0 0
    %234 = vmatpush1.bf16.msra.mxu0 %v224
    %235 = vmatprep.subr.bf16.mxu0 0
    %236 = vmatpush1.bf16.msra.mxu0 %v223
    %237 = vmatprep.subr.bf16.mxu0 0
    %238 = vmatpush1.bf16.msra.mxu0 %v222
    %239 = vmatprep.subr.bf16.mxu0 0
    %240 = vmatpush1.bf16.msra.mxu0 %v221
    %241 = vmatprep.subr.bf16.mxu0 0
    %242 = vmatpush1.bf16.msra.mxu0 %v220
    %243 = vmatprep.subr.bf16.mxu0 0
    %244 = vmatpush1.bf16.msra.mxu0 %v219
    %245 = vmatprep.subr.bf16.mxu0 0
    %246 = vmatpush1.bf16.msra.mxu0 %v218
    %247 = vmatprep.subr.bf16.mxu0 0
    %248 = vmatpush1.bf16.msra.mxu0 %v217
    %249 = vmatprep.subr.bf16.mxu0 0
    %250 = vmatpush2.bf16.msra.mxu0 0
    %251 = vmatprep.subr.bf16.mxu0 0
    %252 = vmatpush2.bf16.msra.mxu0 0
    %253 = vmatprep.subr.bf16.mxu0 0
    %254 = vmatpush2.bf16.msra.mxu0 0
    %255 = vmatprep.subr.bf16.mxu0 0
    %256 = vmatpush2.bf16.msra.mxu0 0
    %257 = vmatprep.subr.bf16.mxu0 0
    %258 = vmatpush2.bf16.msra.mxu0 0
    %259 = vmatprep.subr.bf16.mxu0 0
    %260 = vmatpush2.bf16.msra.mxu0 0
    %261 = vmatprep.subr.bf16.mxu0 0
    %262 = vmatpush2.bf16.msra.mxu0 0
    %263 = vmatprep.subr.bf16.mxu0 0
    %264 = vmatpush2.bf16.msra.mxu0 0
    %265 = vmatprep.mubr.bf16.mxu0 0
    %266 = vmatmul.mubr.bf16.gmra.mxu0 %v161
    %v267 = vpop.f32.mrf.mxu0
    %v268 = vadd.f32 %v183, %v267
    %v269 = vpop.f32.mrf.mxu0
    %v270 = vpop.f32.mrf.mxu0
    %v271 = vpop.f32.mrf.mxu0
    %272 = vdwg.mxu0
    %v273 = vmax.f32 %v268, 0.0
    %v274 = vpack.c.bf16 %v273, %v273
    %v275 = vld [vmem:[#allocation8] sm:$0xf]
    %v276 = vld [vmem:[#allocation8 + $0x4] sm:$0xf]
    %v277 = vld [vmem:[#allocation8 + $0x8] sm:$0xf]
    %v278 = vld [vmem:[#allocation8 + $0xc] sm:$0xf]
    %v279 = vld [vmem:[#allocation8 + $0x10] sm:$0xf]
    %v280 = vld [vmem:[#allocation8 + $0x14] sm:$0xf]
    %v281 = vld [vmem:[#allocation8 + $0x18] sm:$0xf]
    %v282 = vld [vmem:[#allocation8 + $0x1c] sm:$0xf]
    %v283 = vld [vmem:[#allocation8 + $0x20] sm:$0xf]
    %v284 = vld [vmem:[#allocation8 + $0x24] sm:$0xf]
    %v285 = vld [vmem:[#allocation8 + $0x28] sm:$0xf]
    %v286 = vld [vmem:[#allocation8 + $0x2c] sm:$0xf]
    %v287 = vld [vmem:[#allocation8 + $0x30] sm:$0xf]
    %v288 = vld [vmem:[#allocation8 + $0x34] sm:$0xf]
    %v289 = vld [vmem:[#allocation8 + $0x38] sm:$0xf]
    %v290 = vld [vmem:[#allocation8 + $0x3c] sm:$0xf]
    %v291 = vld [vmem:[%s6] sm:$0x1]
    %v293 = vlaneseq
    %v294 = vshrl.u32 %v293, 7
    %v295 = vsub.s32 0, %v294
    %v296 = vrot.slane %v291, %v295
    %v314 = vunpack.c.l.b16 %v275
    %v315 = vunpack.c.l.b16 %v276
    %v316 = vunpack.c.l.b16 %v277
    %v317 = vunpack.c.l.b16 %v278
    %v318 = vunpack.c.l.b16 %v279
    %v319 = vunpack.c.l.b16 %v280
    %v320 = vunpack.c.l.b16 %v281
    %v321 = vunpack.c.l.b16 %v282
    %v322 = vunpack.c.l.b16 %v283
    %v323 = vunpack.c.l.b16 %v284
    %v324 = vunpack.c.l.b16 %v285
    %v325 = vunpack.c.l.b16 %v286
    %v326 = vunpack.c.l.b16 %v287
    %v327 = vunpack.c.l.b16 %v288
    %v328 = vunpack.c.l.b16 %v289
    %v329 = vunpack.c.l.b16 %v290
    %v330 = vpack.c.b16 %v315, %v314
    %v331 = vpack.c.b16 %v317, %v316
    %v332 = vpack.c.b16 %v319, %v318
    %v333 = vpack.c.b16 %v321, %v320
    %v334 = vpack.c.b16 %v323, %v322
    %v335 = vpack.c.b16 %v325, %v324
    %v336 = vpack.c.b16 %v327, %v326
    %v337 = vpack.c.b16 %v329, %v328
    %346 = vmatprep.subr.bf16.mxu0 0
    %347 = vmatpush1.bf16.msra.mxu0 %v337
    %348 = vmatprep.subr.bf16.mxu0 0
    %349 = vmatpush1.bf16.msra.mxu0 %v336
    %350 = vmatprep.subr.bf16.mxu0 0
    %351 = vmatpush1.bf16.msra.mxu0 %v335
    %352 = vmatprep.subr.bf16.mxu0 0
    %353 = vmatpush1.bf16.msra.mxu0 %v334
    %354 = vmatprep.subr.bf16.mxu0 0
    %355 = vmatpush1.bf16.msra.mxu0 %v333
    %356 = vmatprep.subr.bf16.mxu0 0
    %357 = vmatpush1.bf16.msra.mxu0 %v332
    %358 = vmatprep.subr.bf16.mxu0 0
    %359 = vmatpush1.bf16.msra.mxu0 %v331
    %360 = vmatprep.subr.bf16.mxu0 0
    %361 = vmatpush1.bf16.msra.mxu0 %v330
    %362 = vmatprep.subr.bf16.mxu0 0
    %363 = vmatpush2.bf16.msra.mxu0 0
    %364 = vmatprep.subr.bf16.mxu0 0
    %365 = vmatpush2.bf16.msra.mxu0 0
    %366 = vmatprep.subr.bf16.mxu0 0
    %367 = vmatpush2.bf16.msra.mxu0 0
    %368 = vmatprep.subr.bf16.mxu0 0
    %369 = vmatpush2.bf16.msra.mxu0 0
    %370 = vmatprep.subr.bf16.mxu0 0
    %371 = vmatpush2.bf16.msra.mxu0 0
    %372 = vmatprep.subr.bf16.mxu0 0
    %373 = vmatpush2.bf16.msra.mxu0 0
    %374 = vmatprep.subr.bf16.mxu0 0
    %375 = vmatpush2.bf16.msra.mxu0 0
    %376 = vmatprep.subr.bf16.mxu0 0
    %377 = vmatpush2.bf16.msra.mxu0 0
    %378 = vmatprep.mubr.bf16.mxu0 0
    %379 = vmatmul.mubr.bf16.gmra.mxu0 %v274
    %v380 = vpop.f32.mrf.mxu0
    %v381 = vadd.f32 %v296, %v380
    %v382 = vpop.f32.mrf.mxu0
    %v383 = vpop.f32.mrf.mxu0
    %v384 = vpop.f32.mrf.mxu0
    %385 = vdwg.mxu0
    %v386 = vmax.f32 %v381, 0.0
    %v387 = vpack.c.bf16 %v386, %v386
    %v388 = vld [vmem:[#allocation10] sm:$0xf]
    %v389 = vld [vmem:[#allocation10 + $0x4] sm:$0xf]
    %v390 = vld [vmem:[#allocation10 + $0x8] sm:$0xf]
    %v391 = vld [vmem:[#allocation10 + $0xc] sm:$0xf]
    %v392 = vld [vmem:[#allocation10 + $0x10] sm:$0xf]
    %v393 = vld [vmem:[#allocation10 + $0x14] sm:$0xf]
    %v394 = vld [vmem:[#allocation10 + $0x18] sm:$0xf]
    %v395 = vld [vmem:[#allocation10 + $0x1c] sm:$0xf]
    %v396 = vld [vmem:[#allocation10 + $0x20] sm:$0xf]
    %v397 = vld [vmem:[#allocation10 + $0x24] sm:$0xf]
    %v398 = vld [vmem:[#allocation10 + $0x28] sm:$0xf]
    %v399 = vld [vmem:[#allocation10 + $0x2c] sm:$0xf]
    %v400 = vld [vmem:[#allocation10 + $0x30] sm:$0xf]
    %v401 = vld [vmem:[#allocation10 + $0x34] sm:$0xf]
    %v402 = vld [vmem:[#allocation10 + $0x38] sm:$0xf]
    %v403 = vld [vmem:[#allocation10 + $0x3c] sm:$0xf]
    %v404 = vld [vmem:[%s8] sm:$0x1]
    %v406 = vlaneseq
    %v407 = vshrl.u32 %v406, 7
    %v408 = vsub.s32 0, %v407
    %v409 = vrot.slane %v404, %v408
    %v427 = vunpack.c.l.b16 %v388
    %v428 = vunpack.c.l.b16 %v389
    %v429 = vunpack.c.l.b16 %v390
    %v430 = vunpack.c.l.b16 %v391
    %v431 = vunpack.c.l.b16 %v392
    %v432 = vunpack.c.l.b16 %v393
    %v433 = vunpack.c.l.b16 %v394
    %v434 = vunpack.c.l.b16 %v395
    %v435 = vunpack.c.l.b16 %v396
    %v436 = vunpack.c.l.b16 %v397
    %v437 = vunpack.c.l.b16 %v398
    %v438 = vunpack.c.l.b16 %v399
    %v439 = vunpack.c.l.b16 %v400
    %v440 = vunpack.c.l.b16 %v401
    %v441 = vunpack.c.l.b16 %v402
    %v442 = vunpack.c.l.b16 %v403
    %v443 = vpack.c.b16 %v428, %v427
    %v444 = vpack.c.b16 %v430, %v429
    %v445 = vpack.c.b16 %v432, %v431
    %v446 = vpack.c.b16 %v434, %v433
    %v447 = vpack.c.b16 %v436, %v435
    %v448 = vpack.c.b16 %v438, %v437
    %v449 = vpack.c.b16 %v440, %v439
    %v450 = vpack.c.b16 %v442, %v441
    %459 = vmatprep.subr.bf16.mxu0 0
    %460 = vmatpush1.bf16.msra.mxu0 %v450
    %461 = vmatprep.subr.bf16.mxu0 0
    %462 = vmatpush1.bf16.msra.mxu0 %v449
    %463 = vmatprep.subr.bf16.mxu0 0
    %464 = vmatpush1.bf16.msra.mxu0 %v448
    %465 = vmatprep.subr.bf16.mxu0 0
    %466 = vmatpush1.bf16.msra.mxu0 %v447
    %467 = vmatprep.subr.bf16.mxu0 0
    %468 = vmatpush1.bf16.msra.mxu0 %v446
    %469 = vmatprep.subr.bf16.mxu0 0
    %470 = vmatpush1.bf16.msra.mxu0 %v445
    %471 = vmatprep.subr.bf16.mxu0 0
    %472 = vmatpush1.bf16.msra.mxu0 %v444
    %473 = vmatprep.subr.bf16.mxu0 0
    %474 = vmatpush1.bf16.msra.mxu0 %v443
    %475 = vmatprep.subr.bf16.mxu0 0
    %476 = vmatpush2.bf16.msra.mxu0 0
    %477 = vmatprep.subr.bf16.mxu0 0
    %478 = vmatpush2.bf16.msra.mxu0 0
    %479 = vmatprep.subr.bf16.mxu0 0
    %480 = vmatpush2.bf16.msra.mxu0 0
    %481 = vmatprep.subr.bf16.mxu0 0
    %482 = vmatpush2.bf16.msra.mxu0 0
    %483 = vmatprep.subr.bf16.mxu0 0
    %484 = vmatpush2.bf16.msra.mxu0 0
    %485 = vmatprep.subr.bf16.mxu0 0
    %486 = vmatpush2.bf16.msra.mxu0 0
    %487 = vmatprep.subr.bf16.mxu0 0
    %488 = vmatpush2.bf16.msra.mxu0 0
    %489 = vmatprep.subr.bf16.mxu0 0
    %490 = vmatpush2.bf16.msra.mxu0 0
    %491 = vmatprep.mubr.bf16.mxu0 0
    %492 = vmatmul.mubr.bf16.gmra.mxu0 %v387
    %v493 = vpop.f32.mrf.mxu0
    %v494 = vadd.f32 %v409, %v493
    %v495 = vpop.f32.mrf.mxu0
    %v496 = vpop.f32.mrf.mxu0
    %v497 = vpop.f32.mrf.mxu0
    %498 = vdwg.mxu0
    %499 = vst [vmem:[#allocation11] sm:$0xff] %v494
    // Predicated region
    $region58: #{tpu_custom_call.1} parent=1 // pred_check
      _
    $region59: #{tpu_custom_call.1} parent=1 // pred_check_branch
      %501 = sbr.rel (0) target = $region61
    $region60: #{tpu_custom_call.1} parent=1 // pred_region
      %s503 = ssub.s32 128, 128
      %504 = vsyncadd [#allocation4], %s503
      %s506 = sshll.u32 [#allocation11], 4
      %s507 = int_to_ptr.vmem [resolvable:$true] %s506
      %509 = dma.vmem_to_hbm [thread:$0]  %s507, 128, %s9, [#allocation4]
    $region61: #{tpu_custom_call.1} parent=1 // pred_fallthru
      _
    // Predicated region
    $region62: #{tpu_custom_call.1} parent=1 // pred_check
      _
    $region63: #{tpu_custom_call.1} parent=1 // pred_check_branch
      %511 = sbr.rel (0) target = $region65
    $region64: #{tpu_custom_call.1} parent=1 // pred_region
      %512 = dma.done [#allocation4], 128
    $region65: #{tpu_custom_call.1} parent=1 // pred_fallthru
      _
    %513 = vsyncpa [#allocation3], 1
    %514 = vsyncpa [#allocation6], 1
    %515 = vsyncpa [#allocation9], 1
    %516 = vsyncpa [#allocation4], 1

</llo_original>
